<compile_context>
chip_gen: v6e
topology: v6e:2x2x1
jax: 0.10.0
libtpu: 0.0.40
codegen_flags: <defaults>
</compile_context>

<pallas_src>
import jax
import jax.numpy as jnp
from jax.experimental import pallas as pl
from jax.experimental.pallas import tpu as pltpu


LANE = 128      # TPU lane width (last-dim tiling unit)
SUBLANE = 16    # batch-tile granularity (covers f32 / bf16 sublane packing)


def _round_up(n, m):
    return ((n + m - 1) // m) * m


def _vmem_budget_bytes():
    """Usable per-kernel VMEM budget, well under physical capacity."""
    try:
        cap = int(pltpu.get_tpu_info().vmem_capacity_bytes)
    except Exception:
        cap = 64 * 1024 * 1024            # conservative fallback (v7x per-TC)
    return int(cap * 0.80)                # ~51 MiB on v7x, ~102 MiB on v5e/v6e


def _resident_vmem_need(bt, f_pad, x_bytes, w_bytes):
    return (2 * bt * f_pad * x_bytes                 # x tile, double buffered
            + 2 * bt * f_pad * 4                     # f32 out tile, double buffered
            + 2 * 2 * f_pad * f_pad * w_bytes        # W1 + W2 (counted 2x-buffered)
            + 2 * 2 * f_pad * 4)                     # b1 + b2


def _tiled_vmem_need(bt, ht, f_pad, x_bytes, w_bytes):
    return (2 * bt * f_pad * x_bytes                 # x tile
            + 2 * bt * f_pad * 4                     # f32 out tile
            + 2 * f_pad * ht * w_bytes               # W1 column slab
            + 2 * ht * f_pad * w_bytes               # W2 row slab
            + 2 * (ht + f_pad) * 4)                  # bias slabs


# ---------------------------------------------------------------------------
# Kernels
# ---------------------------------------------------------------------------

def _resident_kernel(x_ref, w1_ref, b1_ref, w2_ref, b2_ref, o_ref):
    """relu(x @ W1 + b1) @ W2 + b2 with both weights VMEM-resident.

    Grid axis 0: batch tiles ("parallel").  Output / accumulation are f32.
    """
    h = jnp.dot(x_ref[...], w1_ref[...], preferred_element_type=jnp.float32)
    h = jnp.maximum(h + b1_ref[...], 0.0)
    y = jnp.dot(h.astype(w2_ref.dtype), w2_ref[...],
                preferred_element_type=jnp.float32)
    o_ref[...] = y + b2_ref[...]


def _tiled_kernel(x_ref, w1_ref, b1_ref, w2_ref, b2_ref, o_ref):
    """Hidden-slab j of relu(x @ W1 + b1) @ W2 + b2, accumulated into f32 o_ref.

    Grid axis 0: batch tiles ("parallel")
    Grid axis 1: hidden slabs ("arbitrary" reduction, accumulate in o_ref)
    """
    j = pl.program_id(1)

    h = jnp.dot(x_ref[...], w1_ref[...], preferred_element_type=jnp.float32)
    h = jnp.maximum(h + b1_ref[...], 0.0)
    p = jnp.dot(h.astype(w2_ref.dtype), w2_ref[...],
                preferred_element_type=jnp.float32)

    @pl.when(j == 0)
    def _init():
        o_ref[...] = p + b2_ref[...]

    @pl.when(j != 0)
    def _accumulate():
        o_ref[...] += p


# ---------------------------------------------------------------------------
# One-time parameter preparation (pad / cast / layout + tiling plan)
# ---------------------------------------------------------------------------

def prepare_params(w1, b1, w2, b2, *, matmul_dtype=jnp.bfloat16,
                   hidden_tile=None, batch_tile_cap=None, force_tiled=False):
    """Pad weights to lane-dense F, cast to the MXU dtype, pick a tiling plan.

    w1, w2: (F, F) stored (in, out)  [= PyTorch nn.Linear weight.T]
    b1, b2: (F,) or (1, F)
    Returns a params dict consumed by projection_network().
    """
    F = w1.shape[0]
    assert w1.shape == (F, F) and w2.shape == (F, F)
    b1 = jnp.reshape(b1, (1, F)).astype(jnp.float32)
    b2 = jnp.reshape(b2, (1, F)).astype(jnp.float32)

    w_dtype = matmul_dtype if matmul_dtype is not None else w1.dtype
    w_bytes = jnp.dtype(w_dtype).itemsize
    x_bytes = w_bytes if matmul_dtype is not None else 4   # x cast in wrapper

    budget = _vmem_budget_bytes()
    f_lane = _round_up(F, LANE)

    plan = None
    if not force_tiled:
        # -------- resident-weight plan: weights DMA'd once, stay in VMEM ----
        bt = batch_tile_cap if batch_tile_cap is not None else 512
        bt = max(SUBLANE, _round_up(min(bt, 1024), SUBLANE))
        while bt >= SUBLANE:
            if _resident_vmem_need(bt, f_lane, x_bytes, w_bytes) <= budget:
                plan = dict(tiled=False, F_pad=f_lane, hidden_tile=None,
                            batch_tile_cap=bt)
                break
            bt = max(SUBLANE, bt // 2)
            if bt == SUBLANE and \
                    _resident_vmem_need(bt, f_lane, x_bytes, w_bytes) > budget:
                break

    if plan is None:
        # -------- tiled plan: stream hidden-dim slabs of W1 / W2 ------------
        ht = hidden_tile if hidden_tile is not None else 512
        ht = max(LANE, (min(ht, 2048) // LANE) * LANE)
        ht = min(ht, f_lane)
        # Larger default batch tile when streaming weights (clears the v6e/v5e
        # HBM roofline); shrinks automatically on v7x's smaller VMEM.
        bt = batch_tile_cap if batch_tile_cap is not None else 1024
        bt = max(SUBLANE, _round_up(min(bt, 2048), SUBLANE))
        f_pad = _round_up(F, ht)                    # pad F up to a slab multiple
        while _tiled_vmem_need(bt, ht, f_pad, x_bytes, w_bytes) > budget \
                and bt > SUBLANE:
            bt = max(SUBLANE, bt // 2)
        while _tiled_vmem_need(bt, ht, f_pad, x_bytes, w_bytes) > budget \
                and ht > LANE:
            ht -= LANE
            f_pad = _round_up(F, ht)
        plan = dict(tiled=True, F_pad=f_pad, hidden_tile=ht, batch_tile_cap=bt)

    f_pad = plan["F_pad"]
    w1p = jnp.pad(w1, ((0, f_pad - F), (0, f_pad - F))).astype(w_dtype)
    w2p = jnp.pad(w2, ((0, f_pad - F), (0, f_pad - F))).astype(w_dtype)
    b1p = jnp.pad(b1, ((0, 0), (0, f_pad - F)))
    b2p = jnp.pad(b2, ((0, 0), (0, f_pad - F)))

    if plan["tiled"]:
        ht = plan["hidden_tile"]
        nj = f_pad // ht
        # Contiguous column slabs: slab j == w1p[:, j*ht:(j+1)*ht].
        w1p = w1p.reshape(f_pad, nj, ht).transpose(1, 0, 2)

    params = dict(plan)
    params.update(w1=w1p, b1=b1p, w2=w2p, b2=b2p, F=F,
                  matmul_dtype=matmul_dtype)
    return params


# ---------------------------------------------------------------------------
# Forward pass
# ---------------------------------------------------------------------------

def projection_network(x, params, *, batch_tile=None):
    """x: (B, F) -> (B, F), using params from prepare_params()."""
    B, F = x.shape
    assert F == params["F"], "feature dim mismatch with prepared params"
    f_pad = params["F_pad"]
    matmul_dtype = params["matmul_dtype"]

    bt = params["batch_tile_cap"] if batch_tile is None else batch_tile
    bt = min(bt, _round_up(B, SUBLANE))
    bt = max(SUBLANE, _round_up(bt, SUBLANE))
    b_pad = _round_up(B, bt)
    nb = b_pad // bt

    xp = jnp.pad(x, ((0, b_pad - B), (0, f_pad - F)))
    if matmul_dtype is not None:
        xp = xp.astype(matmul_dtype)     # cast once: halves x HBM traffic and
                                         # removes per-step VPU casts in-kernel
    x_bytes = jnp.dtype(xp.dtype).itemsize
    w_bytes = jnp.dtype(params["w1"].dtype).itemsize
    budget = _vmem_budget_bytes()

    if not params["tiled"]:
        grid = (nb,)
        in_specs = [
            pl.BlockSpec((bt, f_pad), lambda i: (i, 0)),        # x tile
            pl.BlockSpec((f_pad, f_pad), lambda i: (0, 0)),     # W1 (resident)
            pl.BlockSpec((1, f_pad), lambda i: (0, 0)),         # b1
            pl.BlockSpec((f_pad, f_pad), lambda i: (0, 0)),     # W2 (resident)
            pl.BlockSpec((1, f_pad), lambda i: (0, 0)),         # b2
        ]
        out_specs = pl.BlockSpec((bt, f_pad), lambda i: (i, 0))
        kernel = _resident_kernel
        dims = ("parallel",)
        weight_hbm_bytes = 2 * f_pad * f_pad * w_bytes          # read once
        vmem_need = _resident_vmem_need(bt, f_pad, x_bytes, w_bytes)
        # TODO(synk): when nb == 1 on v7x, add a second "parallel" grid axis
        # over output-feature tiles so both TensorCores get work on tiny batches.
    else:
        ht = params["hidden_tile"]
        nj = f_pad // ht
        grid = (nb, nj)
        in_specs = [
            pl.BlockSpec((bt, f_pad), lambda i, j: (i, 0)),             # x tile
            pl.BlockSpec((None, f_pad, ht), lambda i, j: (j, 0, 0)),    # W1 col slab
            pl.BlockSpec((1, ht), lambda i, j: (0, j)),                 # b1 slab
            pl.BlockSpec((ht, f_pad), lambda i, j: (j, 0)),             # W2 row slab
            pl.BlockSpec((1, f_pad), lambda i, j: (0, 0)),              # b2
        ]
        out_specs = pl.BlockSpec((bt, f_pad), lambda i, j: (i, 0))
        kernel = _tiled_kernel
        dims = ("parallel", "arbitrary")
        weight_hbm_bytes = nb * 2 * f_pad * f_pad * w_bytes     # re-streamed / batch tile
        vmem_need = _tiled_vmem_need(bt, ht, f_pad, x_bytes, w_bytes)
        # (If profiling on v6e shows exposed slab DMA, pipeline_mode=pl.Buffered(3)
        #  on the W1/W2 specs is the next lever; skipped on v7x's 64 MiB VMEM.)

    vmem_limit = int(min(budget,
                         max(32 * 1024 * 1024,
                             int(1.25 * vmem_need) + (1 << 20))))

    cost = pl.CostEstimate(
        flops=int(4 * b_pad * f_pad * f_pad),                   # two (B,F)x(F,F) matmuls
        transcendentals=0,
        bytes_accessed=int(b_pad * f_pad * (x_bytes + 4)        # x in + f32 out
                           + weight_hbm_bytes + 8 * f_pad),
    )

    out = pl.pallas_call(
        kernel,
        out_shape=jax.ShapeDtypeStruct((b_pad, f_pad), jnp.float32),
        grid_spec=pltpu.PrefetchScalarGridSpec(
            num_scalar_prefetch=0,
            grid=grid,
            in_specs=in_specs,
            out_specs=out_specs,
        ),
        compiler_params=pltpu.CompilerParams(
            dimension_semantics=dims,
            vmem_limit_bytes=vmem_limit,
        ),
        cost_estimate=cost,
    )(xp, params["w1"], params["b1"], params["w2"], params["b2"])

    return out[:B, :F].astype(x.dtype)


# ---------------------------------------------------------------------------
# Reference / init helpers and self-test
# ---------------------------------------------------------------------------

def init_params(key, n_features, dtype=jnp.float32):
    """Deterministic synthetic init (PyTorch-Linear-style uniform bounds),
    stored directly in (in, out) layout for the kernel."""
    k1, k2, k3, k4 = jax.random.split(key, 4)
    bound = 1.0 / (n_features ** 0.5)
    w1 = jax.random.uniform(k1, (n_features, n_features), dtype, -bound, bound)
    b1 = jax.random.uniform(k2, (1, n_features), dtype, -bound, bound)
    w2 = jax.random.uniform(k3, (n_features, n_features), dtype, -bound, bound)
    b2 = jax.random.uniform(k4, (1, n_features), dtype, -bound, bound)
    return w1, b1, w2, b2


def reference(x, w1, b1, w2, b2):
    h = jnp.maximum(x @ w1 + b1, 0.0)
    return h @ w2 + b2


if __name__ == "__main__":
    key = jax.random.PRNGKey(0)
    kx, kp, kx2, kp2 = jax.random.split(key, 4)

    # --- small shapes consistent with the module ---------------------------
    batch, n_features = 8, 32
    x = jax.random.normal(kx, (batch, n_features), jnp.float32)
    w1, b1, w2, b2 = init_params(kp, n_features)
    ref = reference(x, w1, b1, w2, b2)

    # 1) Default path: bf16 MXU operands, resident weights.
    params_bf16 = prepare_params(w1, b1, w2, b2)          # matmul_dtype=bf16
    out = jax.block_until_ready(projection_network(x, params_bf16))
    assert out.shape == (batch, n_features)
    assert jnp.allclose(out, ref, atol=5e-2, rtol=5e-2), "bf16 mismatch vs reference"

    # 2) Exact f32 path (resident weights).
    params_f32 = prepare_params(w1, b1, w2, b2, matmul_dtype=None)
    out_f32 = jax.block_until_ready(projection_network(x, params_f32))
    assert jnp.allclose(out_f32, ref, atol=1e-5, rtol=1e-5), "f32 mismatch vs reference"

    # 3) Tiled fallback path (hidden-dim reduction nj=2, ragged batch nb=2, f32).
    batch2, feat2 = 24, 200
    x2 = jax.random.normal(kx2, (batch2, feat2), jnp.float32)
    w1b, b1b, w2b, b2b = init_params(kp2, feat2)
    ref2 = reference(x2, w1b, b1b, w2b, b2b)
    params_tiled = prepare_params(w1b, b1b, w2b, b2b, matmul_dtype=None,
                                  force_tiled=True, hidden_tile=128,
                                  batch_tile_cap=16)
    out2 = jax.block_until_ready(projection_network(x2, params_tiled))
    assert out2.shape == (batch2, feat2)
    assert jnp.allclose(out2, ref2, atol=1e-3, rtol=1e-3), "tiled mismatch vs reference"

    print("KERNEL_OK")
</pallas_src>

<mosaic_0001>
module attributes {stable_mosaic.version = 11 : i64} {
  func.func @_resident_kernel(%arg0: i32, %arg1: memref<16x128xbf16, #tpu.memory_space<vmem>>, %arg2: memref<128x128xbf16, #tpu.memory_space<vmem>>, %arg3: memref<1x128xf32, #tpu.memory_space<vmem>>, %arg4: memref<128x128xbf16, #tpu.memory_space<vmem>>, %arg5: memref<1x128xf32, #tpu.memory_space<vmem>>, %arg6: memref<16x128xf32, #tpu.memory_space<vmem>>) attributes {dimension_semantics = [#tpu.dimension_semantics<parallel>], iteration_bounds = array<i64: 1>, scalar_prefetch = 0 : i64, scratch_operands = 0 : i64, tpu.core_type = #tpu.core_type<tc>, window_params = [{transform_indices = @transform_0, window_bounds = array<i64: 16, 128>}, {pipeline_mode = #tpu.pipeline_mode<synchronous>, transform_indices = @transform_1, window_bounds = array<i64: 128, 128>}, {pipeline_mode = #tpu.pipeline_mode<synchronous>, transform_indices = @transform_2, window_bounds = array<i64: 1, 128>}, {pipeline_mode = #tpu.pipeline_mode<synchronous>, transform_indices = @transform_3, window_bounds = array<i64: 128, 128>}, {pipeline_mode = #tpu.pipeline_mode<synchronous>, transform_indices = @transform_4, window_bounds = array<i64: 1, 128>}, {transform_indices = @transform_5, window_bounds = array<i64: 16, 128>}]} {
    %c0 = arith.constant 0 : index
    %c0_0 = arith.constant 0 : index
    %0 = vector.load %arg1[%c0, %c0_0] : memref<16x128xbf16, #tpu.memory_space<vmem>>, vector<16x128xbf16>
    %c0_1 = arith.constant 0 : index
    %c0_2 = arith.constant 0 : index
    %1 = vector.load %arg2[%c0_1, %c0_2] : memref<128x128xbf16, #tpu.memory_space<vmem>>, vector<128x128xbf16>
    %cst = arith.constant dense<0.000000e+00> : vector<16x128xf32>
    %2 = tpu.matmul %0, %1, %cst {dimension_numbers = #tpu.dot_dimension_numbers<[1], [0], [0], [1], [0, 0, 1, 1], [], []>} : vector<16x128xbf16>, vector<128x128xbf16>, vector<16x128xf32> -> vector<16x128xf32>
    %c0_3 = arith.constant 0 : index
    %c0_4 = arith.constant 0 : index
    %3 = vector.load %arg3[%c0_3, %c0_4] : memref<1x128xf32, #tpu.memory_space<vmem>>, vector<1x128xf32>
    %4 = vector.broadcast %3 : vector<1x128xf32> to vector<16x128xf32>
    %5 = arith.addf %2, %4 : vector<16x128xf32>
    %cst_5 = arith.constant 0.000000e+00 : f32
    %6 = vector.broadcast %cst_5 : f32 to vector<16x128xf32>
    %7 = arith.maximumf %5, %6 : vector<16x128xf32>
    %8 = arith.truncf %7 : vector<16x128xf32> to vector<16x128xbf16>
    %c0_6 = arith.constant 0 : index
    %c0_7 = arith.constant 0 : index
    %9 = vector.load %arg4[%c0_6, %c0_7] : memref<128x128xbf16, #tpu.memory_space<vmem>>, vector<128x128xbf16>
    %cst_8 = arith.constant dense<0.000000e+00> : vector<16x128xf32>
    %10 = tpu.matmul %8, %9, %cst_8 {dimension_numbers = #tpu.dot_dimension_numbers<[1], [0], [0], [1], [0, 0, 1, 1], [], []>} : vector<16x128xbf16>, vector<128x128xbf16>, vector<16x128xf32> -> vector<16x128xf32>
    %c0_9 = arith.constant 0 : index
    %c0_10 = arith.constant 0 : index
    %11 = vector.load %arg5[%c0_9, %c0_10] : memref<1x128xf32, #tpu.memory_space<vmem>>, vector<1x128xf32>
    %12 = vector.broadcast %11 : vector<1x128xf32> to vector<16x128xf32>
    %13 = arith.addf %10, %12 : vector<16x128xf32>
    %c0_11 = arith.constant 0 : index
    %c0_12 = arith.constant 0 : index
    %14 = vector.load %arg6[%c0_11, %c0_12] : memref<16x128xf32, #tpu.memory_space<vmem>>, vector<16x128xf32>
    tpu.vector_store %arg6[%c0_11, %c0_12], %13 {strides = array<i32>} : memref<16x128xf32, #tpu.memory_space<vmem>>, vector<16x128xf32>,
    return
  }
  func.func @transform_0(%arg0: i32) -> (i32, i32) {
    %c0_i32 = arith.constant 0 : i32
    %c0_i32_0 = arith.constant 0 : i32
    return %arg0, %c0_i32 : i32, i32
  }
  func.func @transform_1(%arg0: i32) -> (i32, i32) {
    %c0_i32 = arith.constant 0 : i32
    %c0_i32_0 = arith.constant 0 : i32
    %c0_i32_1 = arith.constant 0 : i32
    return %c0_i32, %c0_i32_0 : i32, i32
  }
  func.func @transform_2(%arg0: i32) -> (i32, i32) {
    %c0_i32 = arith.constant 0 : i32
    %c0_i32_0 = arith.constant 0 : i32
    %c0_i32_1 = arith.constant 0 : i32
    return %c0_i32, %c0_i32_0 : i32, i32
  }
  func.func @transform_3(%arg0: i32) -> (i32, i32) {
    %c0_i32 = arith.constant 0 : i32
    %c0_i32_0 = arith.constant 0 : i32
    %c0_i32_1 = arith.constant 0 : i32
    return %c0_i32, %c0_i32_0 : i32, i32
  }
  func.func @transform_4(%arg0: i32) -> (i32, i32) {
    %c0_i32 = arith.constant 0 : i32
    %c0_i32_0 = arith.constant 0 : i32
    %c0_i32_1 = arith.constant 0 : i32
    return %c0_i32, %c0_i32_0 : i32, i32
  }
  func.func @transform_5(%arg0: i32) -> (i32, i32) {
    %c0_i32 = arith.constant 0 : i32
    %c0_i32_0 = arith.constant 0 : i32
    return %arg0, %c0_i32 : i32, i32
  }
}

</mosaic_0001>

<llo_original>
// kernel: tpu_custom_call.1
$region0: #{tpu_custom_call.1}
  #allocation0 [shape = 'u32[]', space=smem, size = 0x4, offset = 0x4, fixed_abs, tag = 'smem constant byte address 0x4 - core index']
  #allocation1 [shape = 'u32[144,128]{1,0:T(1,128)}', space=vmem, size = 0x12000, scoped, tag = 'internal scratch']
  %s0 = inlined_call_operand.hbm [shape: bf16[16,128], index: 0, kind: input, shape index: {}]
  %s1 = inlined_call_operand.hbm [shape: bf16[128,128], index: 1, kind: input, shape index: {}]
  %s2 = inlined_call_operand.vmem [shape: f32[1,128], index: 2, kind: input, shape index: {}]
  %s3 = inlined_call_operand.hbm [shape: bf16[128,128], index: 3, kind: input, shape index: {}]
  %s4 = inlined_call_operand.vmem [shape: f32[1,128], index: 4, kind: input, shape index: {}]
  %s5 = inlined_call_operand.hbm [shape: f32[16,128], index: 5, kind: output, shape index: {}]
  %s6 = sld [smem:[#allocation0]]
  $region42: #{tpu_custom_call.1} parent=0
    _
  %s8 = ssub.s32 1, %s6
  %s9 = scalar_select 0, %s8, %s6
  $region1: #{tpu_custom_call.1} parent=0
    #allocation2 [shape = 'u8[4096]{0}', space=vmem, size = 0x1000, scoped, tag = 'input window, operand 0, single buffered']
    #allocation3 [shape = 's32[1]{0}', space=sflag, size = 0x4, scoped, tag = 'scoped memory for tpu_custom_call.1']
    #allocation4 [shape = 's32[1]{0}', space=sflag, size = 0x4, scoped, tag = 'scoped memory for tpu_custom_call.1']
    #allocation5 [shape = 'u8[32768]{0}', space=vmem, size = 0x8000, scoped, tag = 'input window, operand 1, single buffered']
    #allocation6 [shape = 's32[1]{0}', space=sflag, size = 0x4, scoped, tag = 'scoped memory for tpu_custom_call.1']
    #allocation7 [shape = 'u8[32768]{0}', space=vmem, size = 0x8000, scoped, tag = 'input window, operand 3, single buffered']
    #allocation8 [shape = 'u8[8192]{0}', space=vmem, size = 0x2000, scoped, tag = 'output window, operand 0, single buffered']
    %10 = vsyncpa [#allocation3], 0
    %11 = vsyncpa [#allocation6], 0
    %12 = vsyncpa [#allocation4], 0
    // Predicated region
    $region2: #{tpu_custom_call.1} parent=1 // pred_check
      _
    $region3: #{tpu_custom_call.1} parent=1 // pred_check_branch
      %14 = sbr.rel (0) target = $region5
    $region4: #{tpu_custom_call.1} parent=1 // pred_region
      %s16 = ssub.s32 128, 128
      %17 = vsyncadd [#allocation3], %s16
      %s18 = sshll.u32 [#allocation2], 4
      %s19 = int_to_ptr.vmem [resolvable:$true] %s18
      %24 = dma.hbm_to_vmem [thread:$0]  %s0, 128, %s19, [#allocation3], 64, 64, 4
    $region5: #{tpu_custom_call.1} parent=1 // pred_fallthru
      _
    // Predicated region
    $region6: #{tpu_custom_call.1} parent=1 // pred_check
      _
    $region7: #{tpu_custom_call.1} parent=1 // pred_check_branch
      %26 = sbr.rel (0) target = $region9
    $region8: #{tpu_custom_call.1} parent=1 // pred_region
      %s28 = ssub.s32 1024, 1024
      %29 = vsyncadd [#allocation6], %s28
      %s30 = sshll.u32 [#allocation5], 4
      %s31 = int_to_ptr.vmem [resolvable:$true] %s30
      %36 = dma.hbm_to_vmem [thread:$0]  %s1, 1024, %s31, [#allocation6], 64, 64, 4
    $region9: #{tpu_custom_call.1} parent=1 // pred_fallthru
      _
    // Predicated region
    $region10: #{tpu_custom_call.1} parent=1 // pred_check
      _
    $region11: #{tpu_custom_call.1} parent=1 // pred_check_branch
      %38 = sbr.rel (0) target = $region13
    $region12: #{tpu_custom_call.1} parent=1 // pred_region
      _
    $region13: #{tpu_custom_call.1} parent=1 // pred_fallthru
      _
    // Predicated region
    $region14: #{tpu_custom_call.1} parent=1 // pred_check
      _
    $region15: #{tpu_custom_call.1} parent=1 // pred_check_branch
      %40 = sbr.rel (0) target = $region17
    $region16: #{tpu_custom_call.1} parent=1 // pred_region
      %s42 = ssub.s32 1024, 1024
      %43 = vsyncadd [#allocation6], %s42
      %s44 = sshll.u32 [#allocation7], 4
      %s45 = int_to_ptr.vmem [resolvable:$true] %s44
      %50 = dma.hbm_to_vmem [thread:$0]  %s3, 1024, %s45, [#allocation6], 64, 64, 4
    $region17: #{tpu_custom_call.1} parent=1 // pred_fallthru
      _
    // Predicated region
    $region18: #{tpu_custom_call.1} parent=1 // pred_check
      _
    $region19: #{tpu_custom_call.1} parent=1 // pred_check_branch
      %52 = sbr.rel (0) target = $region21
    $region20: #{tpu_custom_call.1} parent=1 // pred_region
      _
    $region21: #{tpu_custom_call.1} parent=1 // pred_fallthru
      _
    // Predicated region
    $region22: #{tpu_custom_call.1} parent=1 // pred_check
      _
    $region23: #{tpu_custom_call.1} parent=1 // pred_check_branch
      %54 = sbr.rel (0) target = $region25
    $region24: #{tpu_custom_call.1} parent=1 // pred_region
      %55 = dma.done [#allocation3], 128
    $region25: #{tpu_custom_call.1} parent=1 // pred_fallthru
      _
    // Predicated region
    $region26: #{tpu_custom_call.1} parent=1 // pred_check
      _
    $region27: #{tpu_custom_call.1} parent=1 // pred_check_branch
      %57 = sbr.rel (0) target = $region29
    $region28: #{tpu_custom_call.1} parent=1 // pred_region
      %58 = dma.done [#allocation6], 1024
    $region29: #{tpu_custom_call.1} parent=1 // pred_fallthru
      _
    // Predicated region
    $region30: #{tpu_custom_call.1} parent=1 // pred_check
      _
    $region31: #{tpu_custom_call.1} parent=1 // pred_check_branch
      %60 = sbr.rel (0) target = $region33
    $region32: #{tpu_custom_call.1} parent=1 // pred_region
      %61 = dma.done [#allocation6], 1024
    $region33: #{tpu_custom_call.1} parent=1 // pred_fallthru
      _
    %v63 = vld [vmem:[#allocation2] sm:$0xf]
    %v64 = vld [vmem:[#allocation2 + $0x4] sm:$0xf]
    %v65 = vld [vmem:[#allocation5] sm:$0xf]
    %v66 = vld [vmem:[#allocation5 + $0x4] sm:$0xf]
    %v67 = vld [vmem:[#allocation5 + $0x8] sm:$0xf]
    %v68 = vld [vmem:[#allocation5 + $0xc] sm:$0xf]
    %v69 = vld [vmem:[#allocation5 + $0x10] sm:$0xf]
    %v70 = vld [vmem:[#allocation5 + $0x14] sm:$0xf]
    %v71 = vld [vmem:[#allocation5 + $0x18] sm:$0xf]
    %v72 = vld [vmem:[#allocation5 + $0x1c] sm:$0xf]
    %v73 = vld [vmem:[#allocation5 + $0x20] sm:$0xf]
    %v74 = vld [vmem:[#allocation5 + $0x24] sm:$0xf]
    %v75 = vld [vmem:[#allocation5 + $0x28] sm:$0xf]
    %v76 = vld [vmem:[#allocation5 + $0x2c] sm:$0xf]
    %v77 = vld [vmem:[#allocation5 + $0x30] sm:$0xf]
    %v78 = vld [vmem:[#allocation5 + $0x34] sm:$0xf]
    %v79 = vld [vmem:[#allocation5 + $0x38] sm:$0xf]
    %v80 = vld [vmem:[#allocation5 + $0x3c] sm:$0xf]
    %v81 = vld [vmem:[%s2] sm:$0x1]
    %v83 = vlaneseq
    %v84 = vshrl.u32 %v83, 7
    %v85 = vsub.s32 0, %v84
    %v86 = vrot.slane %v81, %v85
    %v90 = vunpack.c.l.b16 %v63
    %v91 = vunpack.c.l.b16 %v64
    %v92 = vpack.c.b16 %v91, %v90
    %v110 = vunpack.c.l.b16 %v65
    %v111 = vunpack.c.l.b16 %v66
    %v112 = vunpack.c.l.b16 %v67
    %v113 = vunpack.c.l.b16 %v68
    %v114 = vunpack.c.l.b16 %v69
    %v115 = vunpack.c.l.b16 %v70
    %v116 = vunpack.c.l.b16 %v71
    %v117 = vunpack.c.l.b16 %v72
    %v118 = vunpack.c.l.b16 %v73
    %v119 = vunpack.c.l.b16 %v74
    %v120 = vunpack.c.l.b16 %v75
    %v121 = vunpack.c.l.b16 %v76
    %v122 = vunpack.c.l.b16 %v77
    %v123 = vunpack.c.l.b16 %v78
    %v124 = vunpack.c.l.b16 %v79
    %v125 = vunpack.c.l.b16 %v80
    %v126 = vpack.c.b16 %v111, %v110
    %v127 = vpack.c.b16 %v113, %v112
    %v128 = vpack.c.b16 %v115, %v114
    %v129 = vpack.c.b16 %v117, %v116
    %v130 = vpack.c.b16 %v119, %v118
    %v131 = vpack.c.b16 %v121, %v120
    %v132 = vpack.c.b16 %v123, %v122
    %v133 = vpack.c.b16 %v125, %v124
    %142 = vmatprep.subr.bf16.mxu0 0
    %143 = vmatpush1.bf16.msra.mxu0 %v133
    %144 = vmatprep.subr.bf16.mxu0 0
    %145 = vmatpush1.bf16.msra.mxu0 %v132
    %146 = vmatprep.subr.bf16.mxu0 0
    %147 = vmatpush1.bf16.msra.mxu0 %v131
    %148 = vmatprep.subr.bf16.mxu0 0
    %149 = vmatpush1.bf16.msra.mxu0 %v130
    %150 = vmatprep.subr.bf16.mxu0 0
    %151 = vmatpush1.bf16.msra.mxu0 %v129
    %152 = vmatprep.subr.bf16.mxu0 0
    %153 = vmatpush1.bf16.msra.mxu0 %v128
    %154 = vmatprep.subr.bf16.mxu0 0
    %155 = vmatpush1.bf16.msra.mxu0 %v127
    %156 = vmatprep.subr.bf16.mxu0 0
    %157 = vmatpush1.bf16.msra.mxu0 %v126
    %158 = vmatprep.subr.bf16.mxu0 0
    %159 = vmatpush2.bf16.msra.mxu0 0
    %160 = vmatprep.subr.bf16.mxu0 0
    %161 = vmatpush2.bf16.msra.mxu0 0
    %162 = vmatprep.subr.bf16.mxu0 0
    %163 = vmatpush2.bf16.msra.mxu0 0
    %164 = vmatprep.subr.bf16.mxu0 0
    %165 = vmatpush2.bf16.msra.mxu0 0
    %166 = vmatprep.subr.bf16.mxu0 0
    %167 = vmatpush2.bf16.msra.mxu0 0
    %168 = vmatprep.subr.bf16.mxu0 0
    %169 = vmatpush2.bf16.msra.mxu0 0
    %170 = vmatprep.subr.bf16.mxu0 0
    %171 = vmatpush2.bf16.msra.mxu0 0
    %172 = vmatprep.subr.bf16.mxu0 0
    %173 = vmatpush2.bf16.msra.mxu0 0
    %174 = vmatprep.mubr.bf16.mxu0 0
    %175 = vmatmul.mubr.bf16.gmra.mxu0 %v92
    %v176 = vpop.f32.mrf.mxu0
    %v177 = vadd.f32 %v86, %v176
    %v178 = vpop.f32.mrf.mxu0
    %v179 = vpop.f32.mrf.mxu0
    %v180 = vadd.f32 %v86, %v179
    %v181 = vpop.f32.mrf.mxu0
    %182 = vdwg.mxu0
    %v183 = vmax.f32 %v177, 0.0
    %v184 = vmax.f32 %v180, 0.0
    %v185 = vpack.c.bf16 %v184, %v183
    %v186 = vld [vmem:[#allocation7] sm:$0xf]
    %v187 = vld [vmem:[#allocation7 + $0x4] sm:$0xf]
    %v188 = vld [vmem:[#allocation7 + $0x8] sm:$0xf]
    %v189 = vld [vmem:[#allocation7 + $0xc] sm:$0xf]
    %v190 = vld [vmem:[#allocation7 + $0x10] sm:$0xf]
    %v191 = vld [vmem:[#allocation7 + $0x14] sm:$0xf]
    %v192 = vld [vmem:[#allocation7 + $0x18] sm:$0xf]
    %v193 = vld [vmem:[#allocation7 + $0x1c] sm:$0xf]
    %v194 = vld [vmem:[#allocation7 + $0x20] sm:$0xf]
    %v195 = vld [vmem:[#allocation7 + $0x24] sm:$0xf]
    %v196 = vld [vmem:[#allocation7 + $0x28] sm:$0xf]
    %v197 = vld [vmem:[#allocation7 + $0x2c] sm:$0xf]
    %v198 = vld [vmem:[#allocation7 + $0x30] sm:$0xf]
    %v199 = vld [vmem:[#allocation7 + $0x34] sm:$0xf]
    %v200 = vld [vmem:[#allocation7 + $0x38] sm:$0xf]
    %v201 = vld [vmem:[#allocation7 + $0x3c] sm:$0xf]
    %v202 = vld [vmem:[%s4] sm:$0x1]
    %v204 = vlaneseq
    %v205 = vshrl.u32 %v204, 7
    %v206 = vsub.s32 0, %v205
    %v207 = vrot.slane %v202, %v206
    %v225 = vunpack.c.l.b16 %v186
    %v226 = vunpack.c.l.b16 %v187
    %v227 = vunpack.c.l.b16 %v188
    %v228 = vunpack.c.l.b16 %v189
    %v229 = vunpack.c.l.b16 %v190
    %v230 = vunpack.c.l.b16 %v191
    %v231 = vunpack.c.l.b16 %v192
    %v232 = vunpack.c.l.b16 %v193
    %v233 = vunpack.c.l.b16 %v194
    %v234 = vunpack.c.l.b16 %v195
    %v235 = vunpack.c.l.b16 %v196
    %v236 = vunpack.c.l.b16 %v197
    %v237 = vunpack.c.l.b16 %v198
    %v238 = vunpack.c.l.b16 %v199
    %v239 = vunpack.c.l.b16 %v200
    %v240 = vunpack.c.l.b16 %v201
    %v241 = vpack.c.b16 %v226, %v225
    %v242 = vpack.c.b16 %v228, %v227
    %v243 = vpack.c.b16 %v230, %v229
    %v244 = vpack.c.b16 %v232, %v231
    %v245 = vpack.c.b16 %v234, %v233
    %v246 = vpack.c.b16 %v236, %v235
    %v247 = vpack.c.b16 %v238, %v237
    %v248 = vpack.c.b16 %v240, %v239
    %257 = vmatprep.subr.bf16.mxu0 0
    %258 = vmatpush1.bf16.msra.mxu0 %v248
    %259 = vmatprep.subr.bf16.mxu0 0
    %260 = vmatpush1.bf16.msra.mxu0 %v247
    %261 = vmatprep.subr.bf16.mxu0 0
    %262 = vmatpush1.bf16.msra.mxu0 %v246
    %263 = vmatprep.subr.bf16.mxu0 0
    %264 = vmatpush1.bf16.msra.mxu0 %v245
    %265 = vmatprep.subr.bf16.mxu0 0
    %266 = vmatpush1.bf16.msra.mxu0 %v244
    %267 = vmatprep.subr.bf16.mxu0 0
    %268 = vmatpush1.bf16.msra.mxu0 %v243
    %269 = vmatprep.subr.bf16.mxu0 0
    %270 = vmatpush1.bf16.msra.mxu0 %v242
    %271 = vmatprep.subr.bf16.mxu0 0
    %272 = vmatpush1.bf16.msra.mxu0 %v241
    %273 = vmatprep.subr.bf16.mxu0 0
    %274 = vmatpush2.bf16.msra.mxu0 0
    %275 = vmatprep.subr.bf16.mxu0 0
    %276 = vmatpush2.bf16.msra.mxu0 0
    %277 = vmatprep.subr.bf16.mxu0 0
    %278 = vmatpush2.bf16.msra.mxu0 0
    %279 = vmatprep.subr.bf16.mxu0 0
    %280 = vmatpush2.bf16.msra.mxu0 0
    %281 = vmatprep.subr.bf16.mxu0 0
    %282 = vmatpush2.bf16.msra.mxu0 0
    %283 = vmatprep.subr.bf16.mxu0 0
    %284 = vmatpush2.bf16.msra.mxu0 0
    %285 = vmatprep.subr.bf16.mxu0 0
    %286 = vmatpush2.bf16.msra.mxu0 0
    %287 = vmatprep.subr.bf16.mxu0 0
    %288 = vmatpush2.bf16.msra.mxu0 0
    %289 = vmatprep.mubr.bf16.mxu0 0
    %290 = vmatmul.mubr.bf16.gmra.mxu0 %v185
    %v291 = vpop.f32.mrf.mxu0
    %v292 = vadd.f32 %v207, %v291
    %v293 = vpop.f32.mrf.mxu0
    %v294 = vpop.f32.mrf.mxu0
    %v295 = vadd.f32 %v207, %v294
    %v296 = vpop.f32.mrf.mxu0
    %297 = vdwg.mxu0
    %298 = vst [vmem:[#allocation8] sm:$0xff] %v292
    %299 = vst [vmem:[#allocation8 + $0x8] sm:$0xff] %v295
    // Predicated region
    $region34: #{tpu_custom_call.1} parent=1 // pred_check
      _
    $region35: #{tpu_custom_call.1} parent=1 // pred_check_branch
      %301 = sbr.rel (0) target = $region37
    $region36: #{tpu_custom_call.1} parent=1 // pred_region
      %s303 = ssub.s32 256, 256
      %304 = vsyncadd [#allocation4], %s303
      %s305 = sshll.u32 [#allocation8], 4
      %s306 = int_to_ptr.vmem [resolvable:$true] %s305
      %311 = dma.vmem_to_hbm [thread:$0]  %s306, 256, %s5, [#allocation4], 128, 128, 8
    $region37: #{tpu_custom_call.1} parent=1 // pred_fallthru
      _
    // Predicated region
    $region38: #{tpu_custom_call.1} parent=1 // pred_check
      _
    $region39: #{tpu_custom_call.1} parent=1 // pred_check_branch
      %313 = sbr.rel (0) target = $region41
    $region40: #{tpu_custom_call.1} parent=1 // pred_region
      %314 = dma.done [#allocation4], 256
    $region41: #{tpu_custom_call.1} parent=1 // pred_fallthru
      _
    %315 = vsyncpa [#allocation3], 1
    %316 = vsyncpa [#allocation6], 1
    %317 = vsyncpa [#allocation4], 1

</llo_original>
